<compile_context>
chip_gen: v7x
topology: tpu7x:2x2x1
jax: 0.10.0
libtpu: 0.0.40
codegen_flags: <defaults>
</compile_context>

<pallas_src>
import functools
import math

import jax
import jax.numpy as jnp
from jax.experimental import pallas as pl
from jax.experimental.pallas import tpu as pltpu


def _round_down(v, m):
    return (v // m) * m


def _tpu_generation():
    try:
        kind = jax.devices()[0].device_kind.lower()
    except Exception:
        return 0
    for g in (7, 6, 5, 4):
        if f"v{g}" in kind:
            return g
    return 0


def _vmem_capacity_bytes():
    try:
        return int(pltpu.get_tpu_info().vmem_capacity_bytes)
    except Exception:
        return 128 << 20


def _gen_params(gen):
    """(f32 input-block byte target, scoped VMEM limit, min grid steps)."""
    if gen >= 7:   # 2 TensorCores, 64 MiB physical VMEM, ~3.2 TB/s per TC
        return 6 << 20, 48 << 20, 4
    if gen == 6:   # 128 MiB physical VMEM, default scoped limit only 32 MiB
        return 4 << 20, 64 << 20, 3
    if gen == 5:   # 128 MiB physical VMEM, default scoped limit only 16 MiB
        return 4 << 20, 64 << 20, 3
    return 4 << 20, 48 << 20, 2


def _ln_rowwise_kernel(x_ref, g_ref, b_ref, o_ref, *, d, epsilon, tc, n_chunks, unroll):
    """General path: one logical row per block row, reduce over the last dim."""
    inv_d = 1.0 / d
    gamma = g_ref[...].astype(jnp.float32)          # hoisted out of the loop
    beta = b_ref[...].astype(jnp.float32)

    def body(c, carry):
        r0 = pl.multiple_of(c * tc, tc)
        x = x_ref[pl.ds(r0, tc), :].astype(jnp.float32)          # (tc, d)
        mean = jnp.sum(x, axis=-1, keepdims=True) * inv_d
        diff = x - mean
        var = jnp.sum(diff * diff, axis=-1, keepdims=True) * inv_d   # two-pass, fp32
        inv = jax.lax.rsqrt(var + epsilon)
        out = gamma * (diff * inv) + beta
        o_ref[pl.ds(r0, tc), :] = out.astype(o_ref.dtype)
        return carry

    jax.lax.fori_loop(0, n_chunks, body, 0, unroll=unroll)


def _ln_packed_kernel(x_ref, g_ref, b_ref, mask_ref, o_ref, *, d, epsilon, tc, n_chunks, unroll):
    """Lane-packed path: g = 128 // d logical rows live in the 128-lane dim.

    Group-local sums are x @ G where G is the block-diagonal group mask; the
    result is the group sum broadcast onto every lane of the group (MXU work,
    hidden under DMA on v5e/v6e and ~1.2x over HBM time on v7x, cheaper than a
    roll/select tree for these d).
    """
    inv_d = 1.0 / d
    gamma = g_ref[...].astype(jnp.float32)
    beta = b_ref[...].astype(jnp.float32)
    mask = mask_ref[...]                                          # (128, 128) f32

    def body(c, carry):
        r0 = pl.multiple_of(c * tc, tc)
        x = x_ref[pl.ds(r0, tc), :].astype(jnp.float32)           # (tc, 128)
        mean = jnp.dot(x, mask, preferred_element_type=jnp.float32) * inv_d
        diff = x - mean
        var = jnp.dot(diff * diff, mask, preferred_element_type=jnp.float32) * inv_d
        inv = jax.lax.rsqrt(var + epsilon)
        out = gamma * (diff * inv) + beta
        o_ref[pl.ds(r0, tc), :] = out.astype(o_ref.dtype)
        return carry

    jax.lax.fori_loop(0, n_chunks, body, 0, unroll=unroll)


def layer_norm_pallas(x, gamma, beta, epsilon=1e-5, *,
                      target_block_bytes=None, vmem_limit_bytes=None):
    orig_shape = x.shape
    d = orig_shape[-1]
    rows = int(math.prod(orig_shape[:-1])) if len(orig_shape) > 1 else 1

    itemsize = jnp.dtype(x.dtype).itemsize
    packing = {4: 8, 2: 16, 1: 32}.get(itemsize, 8)          # sublane packing unit

    gen = _tpu_generation()
    tb, vl, min_steps = _gen_params(gen)
    if target_block_bytes is None:
        target_block_bytes = tb
    if vmem_limit_bytes is None:
        vmem_limit_bytes = vl
    vmem_limit_bytes = min(vmem_limit_bytes, int(_vmem_capacity_bytes() * 3 // 4))

    # Narrow dtypes: the fp32 in-kernel working set (x cast, diff, out) is ~4/itemsize
    # times the input bytes, so scale the input-block budget accordingly.
    eff_target = max(256 << 10, target_block_bytes * itemsize // 4)

    gamma = jnp.asarray(gamma).reshape(-1)
    beta = jnp.asarray(beta).reshape(-1)

    # ---- layout: lane-dense packing for small d ----
    use_packed = (d < 128) and (128 % d == 0) and rows > 0
    if use_packed:
        g = 128 // d
        d_p = 128
        pad = (-rows) % g                                    # < g rows of padding
        x2 = x.reshape(rows, d)
        if pad:
            x2 = jnp.pad(x2, ((0, pad), (0, 0)))             # keep lane-dense stores
        rows_p = (rows + pad) // g
        x2 = x2.reshape(rows_p, d_p)                         # row-major bitcast reshape
        gamma2 = jnp.tile(gamma, g).reshape(1, d_p)
        beta2 = jnp.tile(beta, g).reshape(1, d_p)
        gi = jax.lax.broadcasted_iota(jnp.int32, (d_p, d_p), 0) // d
        gj = jax.lax.broadcasted_iota(jnp.int32, (d_p, d_p), 1) // d
        mask = (gi == gj).astype(jnp.float32)                # block-diagonal group mask
    else:
        g = 1
        d_p = d
        pad = 0
        rows_p = rows
        x2 = x.reshape(rows_p, d_p)
        gamma2 = gamma.reshape(1, d_p)
        beta2 = beta.reshape(1, d_p)
        mask = None

    # ---- tiling ----
    # tc: rows per in-kernel compute chunk (bounds fp32 temporaries to ~2 MiB each
    # and the lane-padded (tc,1) stats to ~0.5 MiB), independent of the DMA block.
    tc = min(1024, max(packing, _round_down((2 << 20) // (d_p * 4), packing)))

    if rows_p <= tc:
        tr = rows_p                                          # single full-dim block
        tc = rows_p
        # v7x: still split across the two TensorCores when there is enough work.
        if gen >= 7 and rows_p >= 2 * packing:
            tr = max(packing, _round_down(pl.cdiv(rows_p, 2), packing))
            if tr * 2 < rows_p:
                tr += packing
            tc = tr
    else:
        # DMA block rows from the byte target, in multiples of tc.
        tr = max(tc, _round_down(eff_target // max(1, d_p * itemsize), tc))
        tr = min(tr, max(tc, _round_down(rows_p, tc)))
        # Guarantee >= min_steps grid steps (double-buffer overlap / both v7x TCs)
        # without forcing the old 8-way split on mid-size inputs.
        cap = _round_down(rows_p // min_steps, tc)
        if cap >= tc:
            tr = min(tr, cap)

    n_chunks = max(1, tr // tc)
    unroll = n_chunks <= 8
    grid = (pl.cdiv(rows_p, tr),)                            # ragged tail clipped by Pallas

    in_specs = [
        pl.BlockSpec((tr, d_p), lambda i: (i, 0)),           # x tile
        pl.BlockSpec((1, d_p), lambda i: (0, 0)),            # gamma (resident)
        pl.BlockSpec((1, d_p), lambda i: (0, 0)),            # beta  (resident)
    ]
    args = [x2, gamma2, beta2]
    if use_packed:
        in_specs.append(pl.BlockSpec((d_p, d_p), lambda i: (0, 0)))   # group mask (resident)
        args.append(mask)
        kernel = functools.partial(_ln_packed_kernel, d=d, epsilon=epsilon,
                                   tc=tc, n_chunks=n_chunks, unroll=unroll)
    else:
        kernel = functools.partial(_ln_rowwise_kernel, d=d, epsilon=epsilon,
                                   tc=tc, n_chunks=n_chunks, unroll=unroll)

    out = pl.pallas_call(
        kernel,
        out_shape=jax.ShapeDtypeStruct((rows_p, d_p), x.dtype),
        grid_spec=pltpu.PrefetchScalarGridSpec(
            num_scalar_prefetch=0,
            grid=grid,
            in_specs=in_specs,
            out_specs=pl.BlockSpec((tr, d_p), lambda i: (i, 0)),
        ),
        compiler_params=pltpu.CompilerParams(
            dimension_semantics=("parallel",),
            vmem_limit_bytes=vmem_limit_bytes,
        ),
    )(*args)

    if use_packed:
        out = out.reshape(rows + pad, d)
        if pad:
            out = out[:rows]
    return out.reshape(orig_shape)


def layer_norm_ref(x, gamma, beta, epsilon=1e-5):
    xf = x.astype(jnp.float32)
    mean = xf.mean(-1, keepdims=True)
    var = ((xf - mean) ** 2).mean(-1, keepdims=True)
    out = (xf - mean) / jnp.sqrt(var + epsilon)
    out = gamma.astype(jnp.float32) * out + beta.astype(jnp.float32)
    return out.astype(x.dtype)


if __name__ == "__main__":
    key = jax.random.PRNGKey(0)
    k1, k2, k3, k4, k5, k6, k7 = jax.random.split(key, 7)
    eps = 1e-5

    # Case 1: d_model=32 (<128, rows divisible by 128//d) -> lane-packed MXU path.
    x1 = jax.random.normal(k1, (2, 8, 32), dtype=jnp.float32)
    g1 = 1.0 + 0.1 * jax.random.normal(k2, (32,), dtype=jnp.float32)
    b1 = 0.1 * jax.random.normal(k3, (32,), dtype=jnp.float32)
    o1 = jax.block_until_ready(layer_norm_pallas(x1, g1, b1, eps))
    r1 = layer_norm_ref(x1, g1, b1, eps)
    assert o1.shape == x1.shape
    assert jnp.allclose(o1, r1, atol=2e-5, rtol=2e-5)

    # Case 2: d_model=32 with rows NOT divisible by 128//d -> packed path with row pad.
    x2 = jax.random.normal(k4, (2, 9, 32), dtype=jnp.float32)
    o2 = jax.block_until_ready(layer_norm_pallas(x2, g1, b1, eps))
    r2 = layer_norm_ref(x2, g1, b1, eps)
    assert o2.shape == x2.shape
    assert jnp.allclose(o2, r2, atol=2e-5, rtol=2e-5)

    # Case 3: d_model=256 (lane-dense multiple of 128) -> row-wise path.
    x3 = jax.random.normal(k5, (2, 8, 256), dtype=jnp.float32)
    g3 = jnp.full((256,), 1.5, jnp.float32)
    b3 = jnp.full((256,), 0.25, jnp.float32)
    o3 = jax.block_until_ready(layer_norm_pallas(x3, g3, b3, eps))
    r3 = layer_norm_ref(x3, g3, b3, eps)
    assert o3.shape == x3.shape
    assert jnp.allclose(o3, r3, atol=2e-5, rtol=2e-5)

    # Case 4: bf16 input, d_model=64 -> packed path + narrow-dtype block sizing.
    x4 = jax.random.normal(k6, (2, 8, 64), dtype=jnp.float32).astype(jnp.bfloat16)
    g4 = jnp.ones((64,), jnp.bfloat16)
    b4 = jnp.zeros((64,), jnp.bfloat16)
    o4 = jax.block_until_ready(layer_norm_pallas(x4, g4, b4, eps))
    r4 = layer_norm_ref(x4, g4, b4, eps)
    assert o4.shape == x4.shape and o4.dtype == x4.dtype
    assert jnp.allclose(o4.astype(jnp.float32), r4.astype(jnp.float32), atol=2e-2, rtol=2e-2)

    print("KERNEL_OK")
</pallas_src>

<mosaic_0001>
module attributes {stable_mosaic.version = 11 : i64} {
  func.func @_ln_packed_kernel(%arg0: i32, %arg1: memref<4x128xf32, #tpu.memory_space<vmem>>, %arg2: memref<1x128xf32, #tpu.memory_space<vmem>>, %arg3: memref<1x128xf32, #tpu.memory_space<vmem>>, %arg4: memref<128x128xf32, #tpu.memory_space<vmem>>, %arg5: memref<4x128xf32, #tpu.memory_space<vmem>>) attributes {dimension_semantics = [#tpu.dimension_semantics<parallel>], iteration_bounds = array<i64: 1>, scalar_prefetch = 0 : i64, scratch_operands = 0 : i64, tpu.core_type = #tpu.core_type<tc>, window_params = [{transform_indices = @transform_0, window_bounds = array<i64: 4, 128>}, {pipeline_mode = #tpu.pipeline_mode<synchronous>, transform_indices = @transform_1, window_bounds = array<i64: 1, 128>}, {pipeline_mode = #tpu.pipeline_mode<synchronous>, transform_indices = @transform_2, window_bounds = array<i64: 1, 128>}, {pipeline_mode = #tpu.pipeline_mode<synchronous>, transform_indices = @transform_3, window_bounds = array<i64: 128, 128>}, {transform_indices = @transform_4, window_bounds = array<i64: 4, 128>}]} {
    %c0 = arith.constant 0 : index
    %c0_0 = arith.constant 0 : index
    %0 = vector.load %arg2[%c0, %c0_0] : memref<1x128xf32, #tpu.memory_space<vmem>>, vector<1x128xf32>
    %c0_1 = arith.constant 0 : index
    %c0_2 = arith.constant 0 : index
    %1 = vector.load %arg3[%c0_1, %c0_2] : memref<1x128xf32, #tpu.memory_space<vmem>>, vector<1x128xf32>
    %c0_3 = arith.constant 0 : index
    %c0_4 = arith.constant 0 : index
    %2 = vector.load %arg4[%c0_3, %c0_4] : memref<128x128xf32, #tpu.memory_space<vmem>>, vector<128x128xf32>
    %c0_i32 = arith.constant 0 : i32
    %c4_i32 = arith.constant 4 : i32
    %3 = arith.muli %c0_i32, %c4_i32 : i32
    %4 = tpu.assume_multiple %3, 4 : i32
    %5 = arith.index_cast %4 : i32 to index
    %c0_5 = arith.constant 0 : index
    %6 = vector.load %arg1[%5, %c0_5] : memref<4x128xf32, #tpu.memory_space<vmem>>, vector<4x128xf32>
    %cst = arith.constant dense<0.000000e+00> : vector<4x128xf32>
    %7 = tpu.matmul %6, %2, %cst {dimension_numbers = #tpu.dot_dimension_numbers<[1], [0], [0], [1], [0, 0, 1, 1], [], []>} : vector<4x128xf32>, vector<128x128xf32>, vector<4x128xf32> -> vector<4x128xf32>
    %cst_6 = arith.constant 3.125000e-02 : f32
    %8 = vector.broadcast %cst_6 : f32 to vector<4x128xf32>
    %9 = arith.mulf %7, %8 : vector<4x128xf32>
    %10 = arith.subf %6, %9 : vector<4x128xf32>
    %11 = arith.mulf %10, %10 : vector<4x128xf32>
    %cst_7 = arith.constant dense<0.000000e+00> : vector<4x128xf32>
    %12 = tpu.matmul %11, %2, %cst_7 {dimension_numbers = #tpu.dot_dimension_numbers<[1], [0], [0], [1], [0, 0, 1, 1], [], []>} : vector<4x128xf32>, vector<128x128xf32>, vector<4x128xf32> -> vector<4x128xf32>
    %cst_8 = arith.constant 3.125000e-02 : f32
    %13 = vector.broadcast %cst_8 : f32 to vector<4x128xf32>
    %14 = arith.mulf %12, %13 : vector<4x128xf32>
    %cst_9 = arith.constant 9.99999974E-6 : f32
    %15 = vector.broadcast %cst_9 : f32 to vector<4x128xf32>
    %16 = arith.addf %14, %15 : vector<4x128xf32>
    %17 = math.rsqrt %16 : vector<4x128xf32>
    %18 = arith.mulf %10, %17 : vector<4x128xf32>
    %19 = vector.broadcast %0 : vector<1x128xf32> to vector<4x128xf32>
    %20 = arith.mulf %19, %18 : vector<4x128xf32>
    %21 = vector.broadcast %1 : vector<1x128xf32> to vector<4x128xf32>
    %22 = arith.addf %20, %21 : vector<4x128xf32>
    %23 = arith.index_cast %4 : i32 to index
    %c0_10 = arith.constant 0 : index
    %24 = vector.load %arg5[%23, %c0_10] : memref<4x128xf32, #tpu.memory_space<vmem>>, vector<4x128xf32>
    tpu.vector_store %arg5[%23, %c0_10], %22 {strides = array<i32>} : memref<4x128xf32, #tpu.memory_space<vmem>>, vector<4x128xf32>,
    %c1_i32 = arith.constant 1 : i32
    return
  }
  func.func @transform_0(%arg0: i32) -> (i32, i32) {
    %c0_i32 = arith.constant 0 : i32
    %c0_i32_0 = arith.constant 0 : i32
    return %arg0, %c0_i32 : i32, i32
  }
  func.func @transform_1(%arg0: i32) -> (i32, i32) {
    %c0_i32 = arith.constant 0 : i32
    %c0_i32_0 = arith.constant 0 : i32
    %c0_i32_1 = arith.constant 0 : i32
    return %c0_i32, %c0_i32_0 : i32, i32
  }
  func.func @transform_2(%arg0: i32) -> (i32, i32) {
    %c0_i32 = arith.constant 0 : i32
    %c0_i32_0 = arith.constant 0 : i32
    %c0_i32_1 = arith.constant 0 : i32
    return %c0_i32, %c0_i32_0 : i32, i32
  }
  func.func @transform_3(%arg0: i32) -> (i32, i32) {
    %c0_i32 = arith.constant 0 : i32
    %c0_i32_0 = arith.constant 0 : i32
    %c0_i32_1 = arith.constant 0 : i32
    return %c0_i32, %c0_i32_0 : i32, i32
  }
  func.func @transform_4(%arg0: i32) -> (i32, i32) {
    %c0_i32 = arith.constant 0 : i32
    %c0_i32_0 = arith.constant 0 : i32
    return %arg0, %c0_i32 : i32, i32
  }
}

</mosaic_0001>

<llo_original>
// kernel: tpu_custom_call.1
$region0: #{tpu_custom_call.1}
  #allocation0 [shape = 'u32[]', space=smem, size = 0x4, offset = 0x4, fixed_abs, tag = 'smem constant byte address 0x4 - core index']
  #allocation1 [shape = 'u32[144,128]{1,0:T(1,128)}', space=vmem, size = 0x12000, scoped, tag = 'internal scratch']
  %s0 = inlined_call_operand.hbm [shape: f32[4,128], index: 0, kind: input, shape index: {}]
  %s1 = inlined_call_operand.vmem [shape: f32[1,128], index: 1, kind: input, shape index: {}]
  %s2 = inlined_call_operand.vmem [shape: f32[1,128], index: 2, kind: input, shape index: {}]
  %s3 = inlined_call_operand.hbm [shape: f32[128,128], index: 3, kind: input, shape index: {}]
  %s4 = inlined_call_operand.hbm [shape: f32[4,128], index: 4, kind: output, shape index: {}]
  %s5 = sld [smem:[#allocation0]]
  $region34: #{tpu_custom_call.1} parent=0
    _
  %s7 = ssub.s32 1, %s5
  %s8 = scalar_select 0, %s7, %s5
  $region1: #{tpu_custom_call.1} parent=0
    #allocation2 [shape = 'u8[2048]{0}', space=vmem, size = 0x800, scoped, tag = 'input window, operand 0, single buffered']
    #allocation3 [shape = 's32[1]{0}', space=sflag, size = 0x4, scoped, tag = 'scoped memory for tpu_custom_call.1']
    #allocation4 [shape = 's32[1]{0}', space=sflag, size = 0x4, scoped, tag = 'scoped memory for tpu_custom_call.1']
    #allocation5 [shape = 'u8[65536]{0}', space=vmem, size = 0x10000, scoped, tag = 'input window, operand 3, single buffered']
    #allocation6 [shape = 's32[1]{0}', space=sflag, size = 0x4, scoped, tag = 'scoped memory for tpu_custom_call.1']
    #allocation7 [shape = 'u8[2048]{0}', space=vmem, size = 0x800, scoped, tag = 'output window, operand 0, single buffered']
    %9 = vsyncpa [#allocation3], 0
    %10 = vsyncpa [#allocation6], 0
    %11 = vsyncpa [#allocation4], 0
    // Predicated region
    $region2: #{tpu_custom_call.1} parent=1 // pred_check
      _
    $region3: #{tpu_custom_call.1} parent=1 // pred_check_branch
      %13 = sbr.rel (0) target = $region5
    $region4: #{tpu_custom_call.1} parent=1 // pred_region
      %s15 = ssub.s32 64, 64
      %16 = vsyncadd [#allocation3], %s15
      %s18 = sshll.u32 [#allocation2], 4
      %s19 = int_to_ptr.vmem [resolvable:$true] %s18
      %21 = dma.hbm_to_vmem [thread:$0]  %s0, 64, %s19, [#allocation3]
    $region5: #{tpu_custom_call.1} parent=1 // pred_fallthru
      _
    // Predicated region
    $region6: #{tpu_custom_call.1} parent=1 // pred_check
      _
    $region7: #{tpu_custom_call.1} parent=1 // pred_check_branch
      %23 = sbr.rel (0) target = $region9
    $region8: #{tpu_custom_call.1} parent=1 // pred_region
      _
    $region9: #{tpu_custom_call.1} parent=1 // pred_fallthru
      _
    // Predicated region
    $region10: #{tpu_custom_call.1} parent=1 // pred_check
      _
    $region11: #{tpu_custom_call.1} parent=1 // pred_check_branch
      %25 = sbr.rel (0) target = $region13
    $region12: #{tpu_custom_call.1} parent=1 // pred_region
      _
    $region13: #{tpu_custom_call.1} parent=1 // pred_fallthru
      _
    // Predicated region
    $region14: #{tpu_custom_call.1} parent=1 // pred_check
      _
    $region15: #{tpu_custom_call.1} parent=1 // pred_check_branch
      %27 = sbr.rel (0) target = $region17
    $region16: #{tpu_custom_call.1} parent=1 // pred_region
      %s29 = ssub.s32 2048, 2048
      %30 = vsyncadd [#allocation6], %s29
      %s31 = sshll.u32 [#allocation5], 4
      %s32 = int_to_ptr.vmem [resolvable:$true] %s31
      %37 = dma.hbm_to_vmem [thread:$0]  %s3, 2048, %s32, [#allocation6], 128, 128, 8
    $region17: #{tpu_custom_call.1} parent=1 // pred_fallthru
      _
    // Predicated region
    $region18: #{tpu_custom_call.1} parent=1 // pred_check
      _
    $region19: #{tpu_custom_call.1} parent=1 // pred_check_branch
      %39 = sbr.rel (0) target = $region21
    $region20: #{tpu_custom_call.1} parent=1 // pred_region
      %40 = dma.done [#allocation3], 64
    $region21: #{tpu_custom_call.1} parent=1 // pred_fallthru
      _
    // Predicated region
    $region22: #{tpu_custom_call.1} parent=1 // pred_check
      _
    $region23: #{tpu_custom_call.1} parent=1 // pred_check_branch
      %42 = sbr.rel (0) target = $region25
    $region24: #{tpu_custom_call.1} parent=1 // pred_region
      %43 = dma.done [#allocation6], 2048
    $region25: #{tpu_custom_call.1} parent=1 // pred_fallthru
      _
    %v44 = vld [vmem:[%s1] sm:$0x1]
    %v45 = vld [vmem:[%s2] sm:$0x1]
    %v46 = vld [vmem:[#allocation5] sm:$0xff]
    %v47 = vld [vmem:[#allocation5 + $0x8] sm:$0xff]
    %v48 = vld [vmem:[#allocation5 + $0x10] sm:$0xff]
    %v49 = vld [vmem:[#allocation5 + $0x18] sm:$0xff]
    %v50 = vld [vmem:[#allocation5 + $0x20] sm:$0xff]
    %v51 = vld [vmem:[#allocation5 + $0x28] sm:$0xff]
    %v52 = vld [vmem:[#allocation5 + $0x30] sm:$0xff]
    %v53 = vld [vmem:[#allocation5 + $0x38] sm:$0xff]
    %v54 = vld [vmem:[#allocation5 + $0x40] sm:$0xff]
    %v55 = vld [vmem:[#allocation5 + $0x48] sm:$0xff]
    %v56 = vld [vmem:[#allocation5 + $0x50] sm:$0xff]
    %v57 = vld [vmem:[#allocation5 + $0x58] sm:$0xff]
    %v58 = vld [vmem:[#allocation5 + $0x60] sm:$0xff]
    %v59 = vld [vmem:[#allocation5 + $0x68] sm:$0xff]
    %v60 = vld [vmem:[#allocation5 + $0x70] sm:$0xff]
    %v61 = vld [vmem:[#allocation5 + $0x78] sm:$0xff]
    %v62 = vld [vmem:[#allocation2] sm:$0xf]
    %63 = vmatprep.subr.mxu0 0.0
    %64 = vmatpush1.msra.mxu0 %v46
    %65 = vmatprep.subr.mxu0 0.0
    %66 = vmatpush1.msra.mxu0 %v47
    %67 = vmatprep.subr.mxu0 0.0
    %68 = vmatpush1.msra.mxu0 %v48
    %69 = vmatprep.subr.mxu0 0.0
    %70 = vmatpush1.msra.mxu0 %v49
    %71 = vmatprep.subr.mxu0 0.0
    %72 = vmatpush1.msra.mxu0 %v50
    %73 = vmatprep.subr.mxu0 0.0
    %74 = vmatpush1.msra.mxu0 %v51
    %75 = vmatprep.subr.mxu0 0.0
    %76 = vmatpush1.msra.mxu0 %v52
    %77 = vmatprep.subr.mxu0 0.0
    %78 = vmatpush1.msra.mxu0 %v53
    %79 = vmatprep.subr.mxu0 0.0
    %80 = vmatpush1.msra.mxu0 %v54
    %81 = vmatprep.subr.mxu0 0.0
    %82 = vmatpush1.msra.mxu0 %v55
    %83 = vmatprep.subr.mxu0 0.0
    %84 = vmatpush1.msra.mxu0 %v56
    %85 = vmatprep.subr.mxu0 0.0
    %86 = vmatpush1.msra.mxu0 %v57
    %87 = vmatprep.subr.mxu0 0.0
    %88 = vmatpush1.msra.mxu0 %v58
    %89 = vmatprep.subr.mxu0 0.0
    %90 = vmatpush1.msra.mxu0 %v59
    %91 = vmatprep.subr.mxu0 0.0
    %92 = vmatpush1.msra.mxu0 %v60
    %93 = vmatprep.subr.mxu0 0.0
    %94 = vmatpush1.msra.mxu0 %v61
    %95 = vmatprep.subr.mxu0 0.0
    %96 = vmatpush1.msra.mxu0 0.0
    %97 = vmatprep.subr.mxu0 0.0
    %98 = vmatpush1.msra.mxu0 0.0
    %99 = vmatprep.subr.mxu0 0.0
    %100 = vmatpush1.msra.mxu0 0.0
    %101 = vmatprep.subr.mxu0 0.0
    %102 = vmatpush1.msra.mxu0 0.0
    %103 = vmatprep.subr.mxu0 0.0
    %104 = vmatpush1.msra.mxu0 0.0
    %105 = vmatprep.subr.mxu0 0.0
    %106 = vmatpush1.msra.mxu0 0.0
    %107 = vmatprep.subr.mxu0 0.0
    %108 = vmatpush1.msra.mxu0 0.0
    %109 = vmatprep.subr.mxu0 0.0
    %110 = vmatpush1.msra.mxu0 0.0
    %111 = vmatprep.subr.mxu0 0.0
    %112 = vmatpush1.msra.mxu0 0.0
    %113 = vmatprep.subr.mxu0 0.0
    %114 = vmatpush1.msra.mxu0 0.0
    %115 = vmatprep.subr.mxu0 0.0
    %116 = vmatpush1.msra.mxu0 0.0
    %117 = vmatprep.subr.mxu0 0.0
    %118 = vmatpush1.msra.mxu0 0.0
    %119 = vmatprep.subr.mxu0 0.0
    %120 = vmatpush1.msra.mxu0 0.0
    %121 = vmatprep.subr.mxu0 0.0
    %122 = vmatpush1.msra.mxu0 0.0
    %123 = vmatprep.subr.mxu0 0.0
    %124 = vmatpush1.msra.mxu0 0.0
    %125 = vmatprep.subr.mxu0 0.0
    %126 = vmatpush1.msra.mxu0 0.0
    %127 = vmatprep.mubr.f32.mxu0 0.0
    %128 = vmatmul.mubr.f32.gmra.mrb[0].mxu0 %v62
    %v129 = vpop.f32.mrb[0].mxu0
    %v130 = vadd.f32 0.0, %v129
    %v131 = vpop.f32.mrb[0].mxu0
    %132 = vdwg.mxu0
    %v133 = vmul.f32 %v130, 0.03125
    %v134 = vsub.f32 %v62, %v133
    %v135 = vmul.f32 %v134, %v134
    %136 = vmatprep.subr.mxu0 0.0
    %137 = vmatpush1.msra.mxu0 %v46
    %138 = vmatprep.subr.mxu0 0.0
    %139 = vmatpush1.msra.mxu0 %v47
    %140 = vmatprep.subr.mxu0 0.0
    %141 = vmatpush1.msra.mxu0 %v48
    %142 = vmatprep.subr.mxu0 0.0
    %143 = vmatpush1.msra.mxu0 %v49
    %144 = vmatprep.subr.mxu0 0.0
    %145 = vmatpush1.msra.mxu0 %v50
    %146 = vmatprep.subr.mxu0 0.0
    %147 = vmatpush1.msra.mxu0 %v51
    %148 = vmatprep.subr.mxu0 0.0
    %149 = vmatpush1.msra.mxu0 %v52
    %150 = vmatprep.subr.mxu0 0.0
    %151 = vmatpush1.msra.mxu0 %v53
    %152 = vmatprep.subr.mxu0 0.0
    %153 = vmatpush1.msra.mxu0 %v54
    %154 = vmatprep.subr.mxu0 0.0
    %155 = vmatpush1.msra.mxu0 %v55
    %156 = vmatprep.subr.mxu0 0.0
    %157 = vmatpush1.msra.mxu0 %v56
    %158 = vmatprep.subr.mxu0 0.0
    %159 = vmatpush1.msra.mxu0 %v57
    %160 = vmatprep.subr.mxu0 0.0
    %161 = vmatpush1.msra.mxu0 %v58
    %162 = vmatprep.subr.mxu0 0.0
    %163 = vmatpush1.msra.mxu0 %v59
    %164 = vmatprep.subr.mxu0 0.0
    %165 = vmatpush1.msra.mxu0 %v60
    %166 = vmatprep.subr.mxu0 0.0
    %167 = vmatpush1.msra.mxu0 %v61
    %168 = vmatprep.subr.mxu0 0.0
    %169 = vmatpush1.msra.mxu0 0.0
    %170 = vmatprep.subr.mxu0 0.0
    %171 = vmatpush1.msra.mxu0 0.0
    %172 = vmatprep.subr.mxu0 0.0
    %173 = vmatpush1.msra.mxu0 0.0
    %174 = vmatprep.subr.mxu0 0.0
    %175 = vmatpush1.msra.mxu0 0.0
    %176 = vmatprep.subr.mxu0 0.0
    %177 = vmatpush1.msra.mxu0 0.0
    %178 = vmatprep.subr.mxu0 0.0
    %179 = vmatpush1.msra.mxu0 0.0
    %180 = vmatprep.subr.mxu0 0.0
    %181 = vmatpush1.msra.mxu0 0.0
    %182 = vmatprep.subr.mxu0 0.0
    %183 = vmatpush1.msra.mxu0 0.0
    %184 = vmatprep.subr.mxu0 0.0
    %185 = vmatpush1.msra.mxu0 0.0
    %186 = vmatprep.subr.mxu0 0.0
    %187 = vmatpush1.msra.mxu0 0.0
    %188 = vmatprep.subr.mxu0 0.0
    %189 = vmatpush1.msra.mxu0 0.0
    %190 = vmatprep.subr.mxu0 0.0
    %191 = vmatpush1.msra.mxu0 0.0
    %192 = vmatprep.subr.mxu0 0.0
    %193 = vmatpush1.msra.mxu0 0.0
    %194 = vmatprep.subr.mxu0 0.0
    %195 = vmatpush1.msra.mxu0 0.0
    %196 = vmatprep.subr.mxu0 0.0
    %197 = vmatpush1.msra.mxu0 0.0
    %198 = vmatprep.subr.mxu0 0.0
    %199 = vmatpush1.msra.mxu0 0.0
    %200 = vmatprep.mubr.f32.mxu0 0.0
    %201 = vmatmul.mubr.f32.gmra.mrb[0].mxu0 %v135
    %v202 = vpop.f32.mrb[0].mxu0
    %v203 = vadd.f32 0.0, %v202
    %v204 = vpop.f32.mrb[0].mxu0
    %205 = vdwg.mxu0
    %v206 = vmul.f32 %v203, 0.03125
    %v207 = vadd.f32 %v206, 1e-05
    %v208 = vrsqrt.pop %v207
    %v209 = vmul.f32 %v134, %v208
    %v211 = vlaneseq
    %v212 = vshrl.u32 %v211, 7
    %v213 = vsub.s32 0, %v212
    %v214 = vrot.slane %v44, %v213
    %v216 = vmul.f32 %v214, %v209
    %v218 = vlaneseq
    %v219 = vshrl.u32 %v218, 7
    %v220 = vsub.s32 0, %v219
    %v221 = vrot.slane %v45, %v220
    %v223 = vadd.f32 %v216, %v221
    %224 = vst [vmem:[#allocation7] sm:$0xf] %v223
    // Predicated region
    $region26: #{tpu_custom_call.1} parent=1 // pred_check
      _
    $region27: #{tpu_custom_call.1} parent=1 // pred_check_branch
      %226 = sbr.rel (0) target = $region29
    $region28: #{tpu_custom_call.1} parent=1 // pred_region
      %s228 = ssub.s32 64, 64
      %229 = vsyncadd [#allocation4], %s228
      %s231 = sshll.u32 [#allocation7], 4
      %s232 = int_to_ptr.vmem [resolvable:$true] %s231
      %234 = dma.vmem_to_hbm [thread:$0]  %s232, 64, %s4, [#allocation4]
    $region29: #{tpu_custom_call.1} parent=1 // pred_fallthru
      _
    // Predicated region
    $region30: #{tpu_custom_call.1} parent=1 // pred_check
      _
    $region31: #{tpu_custom_call.1} parent=1 // pred_check_branch
      %236 = sbr.rel (0) target = $region33
    $region32: #{tpu_custom_call.1} parent=1 // pred_region
      %237 = dma.done [#allocation4], 64
    $region33: #{tpu_custom_call.1} parent=1 // pred_fallthru
      _
    %238 = vsyncpa [#allocation3], 1
    %239 = vsyncpa [#allocation6], 1
    %240 = vsyncpa [#allocation4], 1

</llo_original>
